<compile_context>
chip_gen: v5e
topology: v5e:2x2
jax: 0.10.0
libtpu: 0.0.40
codegen_flags: <defaults>
</compile_context>

<pallas_src>
import math
import functools
import numpy as np
import jax
import jax.numpy as jnp
from jax.experimental import pallas as pl
from jax.experimental.pallas import tpu as pltpu


def _round_up(x, m):
    return ((x + m - 1) // m) * m


# ---------------------------------------------------------------------------
# Fused decoder-step kernel
# ---------------------------------------------------------------------------
def _decoder_step_kernel(x_ref, h0_ref, c0_ref, w_ref, b_ref, wlin_ref,
                         blin_ref, pred_ref, h_out_ref, c_out_ref,
                         xh_ref, *, num_layers, D, H, k_in_pad):
    # x_ref: (Bp, K_total) zero-padded [x | 0] slab. Load it once into the
    # persistent [x | h] VMEM scratch; the h slot is refreshed per cell below.
    xh_ref[...] = x_ref[...]

    dir_outs = []
    for layer in range(num_layers):
        dir_outs = []
        for d in range(D):
            cell = layer * D + d
            # h slot lane-aligned at k_in_pad (multiple of 128): no rotate.
            xh_ref[:, k_in_pad:] = h0_ref[cell]
            # Single fused MXU dot over [x | h]; zero-padded weight rows make
            # unused slab lanes contribute nothing.
            gates = (jnp.dot(xh_ref[...], w_ref[cell],
                             preferred_element_type=jnp.float32)
                     + b_ref[cell])                    # (Bp, 4H), order i,f,g,o
            sg = jax.nn.sigmoid(gates)                 # full-width EUP pushes,
            tg = jnp.tanh(gates)                       # sliced afterwards
            i_g = sg[:, 0 * H:1 * H]
            f_g = sg[:, 1 * H:2 * H]
            g_g = tg[:, 2 * H:3 * H]
            o_g = sg[:, 3 * H:4 * H]

            c_new = f_g * c0_ref[cell] + i_g * g_g
            h_new = o_g * jnp.tanh(c_new)

            h_out_ref[cell] = h_new
            c_out_ref[cell] = c_new
            dir_outs.append(h_new)                     # stays in vregs

        if layer < num_layers - 1:
            # Layer output becomes the next layer's input slab; written only
            # after every direction of this layer has consumed the slab.
            for d in range(D):
                xh_ref[:, d * H:(d + 1) * H] = dir_outs[d]

    # Final projection as per-direction partial dots (no in-kernel concat);
    # output lane-padded to a full 128-wide slab -> single unmasked store.
    acc = None
    for d in range(D):
        part = jnp.dot(dir_outs[d], wlin_ref[d * H:(d + 1) * H, :],
                       preferred_element_type=jnp.float32)
        acc = part if acc is None else acc + part
    pred_ref[...] = acc + blin_ref[...]


def _make_step_fn(input_size, hidden_size, num_layers, D):
    H = hidden_size
    LD = num_layers * D
    k_in_pad = _round_up(max(input_size, H * D), 128)  # lane-aligned h slot
    k_total = k_in_pad + H                             # width of [x | h] slab
    out_pad = _round_up(input_size, 128)               # lane-dense pred slab

    kernel = functools.partial(_decoder_step_kernel,
                               num_layers=num_layers, D=D, H=H,
                               k_in_pad=k_in_pad)

    def step(params, x, h, c):
        B = x.shape[0]
        Bp = _round_up(max(B, 8), 8)                   # sublane-aligned batch
        x2 = x.reshape(B, input_size)
        # Zero-pad batch -> Bp and lane-pad x into the full slab width.
        x_p = jnp.zeros((Bp, k_total), jnp.float32).at[:B, :input_size].set(x2)
        h_p = jnp.zeros((LD, Bp, H), jnp.float32).at[:, :B, :].set(h)
        c_p = jnp.zeros((LD, Bp, H), jnp.float32).at[:, :B, :].set(c)

        vmem = pl.BlockSpec(memory_space=pltpu.MemorySpace.VMEM)
        pred_p, h_new, c_new = pl.pallas_call(
            kernel,
            out_shape=(jax.ShapeDtypeStruct((Bp, out_pad), jnp.float32),
                       jax.ShapeDtypeStruct((LD, Bp, H), jnp.float32),
                       jax.ShapeDtypeStruct((LD, Bp, H), jnp.float32)),
            in_specs=[vmem] * 7,
            out_specs=(vmem, vmem, vmem),
            scratch_shapes=[pltpu.VMEM((Bp, k_total), jnp.float32)],  # [x|h]
            # h/c state reuses one HBM buffer per step (safe: each cell's
            # state is read before that cell's new state is written).
            input_output_aliases={1: 1, 2: 2},
        )(x_p, h_p, c_p, params['w_stack'], params['b_stack'],
          params['wlin_p'], params['blin_p'])

        pred = pred_p[:B, :input_size]
        return pred, h_new[:, :B, :], c_new[:, :B, :]

    return jax.jit(step)


# ---------------------------------------------------------------------------
# Decoder module (parameter construction + forward)
# ---------------------------------------------------------------------------
class DecoderPallas:
    def __init__(self, cfg, key):
        self.input_size = cfg['Global']['input_size']
        self.output_size = cfg['Global']['output_size']
        self.hidden_size = cfg['Architecture']['hidden_size']
        self.num_layers = cfg['Architecture']['num_layers']
        self.bidirectional = cfg['Architecture']['bidirectional']
        self.D = 2 if self.bidirectional else 1

        H = self.hidden_size
        D = self.D
        L = self.num_layers
        LD = L * D
        k_in_pad = _round_up(max(self.input_size, H * D), 128)
        k_total = k_in_pad + H
        out_pad = _round_up(self.input_size, 128)

        bound = 1.0 / math.sqrt(H)  # PyTorch default uniform init bound

        def uni(k, shape, b=bound):
            return jax.random.uniform(k, shape, jnp.float32, -b, b)

        # Per-cell transposed weights kept for the pure-JAX reference; packed
        # zero-padded stacks built for the fused kernel.
        self.lstm_params = []
        w_stack = jnp.zeros((LD, k_total, 4 * H), jnp.float32)
        b_stack = jnp.zeros((LD, 1, 4 * H), jnp.float32)
        for layer in range(L):
            in_dim = self.input_size if layer == 0 else H * D
            dirs = []
            for d in range(D):
                idx = layer * D + d
                key, k1, k2, k3, k4 = jax.random.split(key, 5)
                w_ih = uni(k1, (4 * H, in_dim))   # PyTorch weight_ih_l{k}
                w_hh = uni(k2, (4 * H, H))        # PyTorch weight_hh_l{k}
                b_ih = uni(k3, (4 * H,))
                b_hh = uni(k4, (4 * H,))
                dirs.append(dict(wih_t=w_ih.T, whh_t=w_hh.T,
                                 bias=(b_ih + b_hh).reshape(1, 4 * H)))
                # x-part at rows [0, in_dim); h-part at rows [k_in_pad, :).
                w_stack = w_stack.at[idx, :in_dim, :].set(w_ih.T)
                w_stack = w_stack.at[idx, k_in_pad:, :].set(w_hh.T)
                b_stack = b_stack.at[idx, 0, :].set(b_ih + b_hh)
            self.lstm_params.append(dirs)

        key, k1, k2 = jax.random.split(key, 3)
        lin_bound = 1.0 / math.sqrt(H * D)
        w_lin = jax.random.uniform(k1, (self.input_size, H * D),
                                   jnp.float32, -lin_bound, lin_bound)
        b_lin = jax.random.uniform(k2, (self.input_size,),
                                   jnp.float32, -lin_bound, lin_bound)
        self.lin_w_t = w_lin.T                          # (H*D, input_size)
        self.lin_b = b_lin.reshape(1, self.input_size)
        wlin_p = (jnp.zeros((H * D, out_pad), jnp.float32)
                  .at[:, :self.input_size].set(w_lin.T))
        blin_p = (jnp.zeros((1, out_pad), jnp.float32)
                  .at[:, :self.input_size].set(b_lin))

        self.params = dict(w_stack=w_stack, b_stack=b_stack,
                           wlin_p=wlin_p, blin_p=blin_p)
        self._step = _make_step_fn(self.input_size, H, L, D)

    def forward(self, x, h, c):
        # x: (B, 1, input_size), h/c: (num_layers*D, B, H)
        return self._step(self.params, x, h, c)


# ---------------------------------------------------------------------------
# Pure-JAX reference (matches PyTorch nn.LSTM / nn.Linear semantics)
# ---------------------------------------------------------------------------
def reference_forward(dec, x, h, c):
    B = x.shape[0]
    H = dec.hidden_size
    layer_in = x.reshape(B, dec.input_size)
    h_new, c_new = [], []
    for layer in range(dec.num_layers):
        dir_outs = []
        for d in range(dec.D):
            idx = layer * dec.D + d
            p = dec.lstm_params[layer][d]
            gates = layer_in @ p['wih_t'] + h[idx] @ p['whh_t'] + p['bias']
            i_g = jax.nn.sigmoid(gates[:, 0 * H:1 * H])
            f_g = jax.nn.sigmoid(gates[:, 1 * H:2 * H])
            g_g = jnp.tanh(gates[:, 2 * H:3 * H])
            o_g = jax.nn.sigmoid(gates[:, 3 * H:4 * H])
            c_ld = f_g * c[idx] + i_g * g_g
            h_ld = o_g * jnp.tanh(c_ld)
            h_new.append(h_ld)
            c_new.append(c_ld)
            dir_outs.append(h_ld)
        layer_in = dir_outs[0] if dec.D == 1 else jnp.concatenate(dir_outs, axis=-1)
    pred = layer_in @ dec.lin_w_t + dec.lin_b
    return pred, jnp.stack(h_new, axis=0), jnp.stack(c_new, axis=0)


if __name__ == "__main__":
    base_cfg = {
        'Global': {'input_size': 16, 'output_size': 16},
        'Architecture': {'hidden_size': 32, 'num_layers': 2,
                         'bidirectional': False},
    }
    B = 2
    key = jax.random.PRNGKey(0)

    for bidir in (False, True):
        cfg = {'Global': dict(base_cfg['Global']),
               'Architecture': dict(base_cfg['Architecture'],
                                    bidirectional=bidir)}
        key, kp, kx, kh, kc = jax.random.split(key, 5)
        dec = DecoderPallas(cfg, kp)

        x = jax.random.normal(kx, (B, 1, cfg['Global']['input_size']),
                              jnp.float32)
        h0 = jax.random.normal(
            kh, (dec.num_layers * dec.D, B, dec.hidden_size), jnp.float32)
        c0 = jax.random.normal(
            kc, (dec.num_layers * dec.D, B, dec.hidden_size), jnp.float32)

        pred, h1, c1 = dec.forward(x, h0, c0)
        jax.block_until_ready((pred, h1, c1))

        pred_r, h_r, c_r = reference_forward(dec, x, h0, c0)
        np.testing.assert_allclose(np.asarray(pred), np.asarray(pred_r),
                                   rtol=1e-4, atol=1e-4)
        np.testing.assert_allclose(np.asarray(h1), np.asarray(h_r),
                                   rtol=1e-4, atol=1e-4)
        np.testing.assert_allclose(np.asarray(c1), np.asarray(c_r),
                                   rtol=1e-4, atol=1e-4)

    print("KERNEL_OK")
</pallas_src>

<mosaic_0001>
module attributes {stable_mosaic.version = 11 : i64} {
  func.func @_decoder_step_kernel(%arg0: memref<8x160xf32, #tpu.memory_space<vmem>>, %arg1: memref<2x8x32xf32, #tpu.memory_space<vmem>>, %arg2: memref<2x8x32xf32, #tpu.memory_space<vmem>>, %arg3: memref<2x160x128xf32, #tpu.memory_space<vmem>>, %arg4: memref<2x1x128xf32, #tpu.memory_space<vmem>>, %arg5: memref<32x128xf32, #tpu.memory_space<vmem>>, %arg6: memref<1x128xf32, #tpu.memory_space<vmem>>, %arg7: memref<8x128xf32, #tpu.memory_space<vmem>>, %arg8: memref<2x8x32xf32, #tpu.memory_space<vmem>>, %arg9: memref<2x8x32xf32, #tpu.memory_space<vmem>>, %arg10: memref<8x160xf32, #tpu.memory_space<vmem>>) attributes {dimension_semantics = [], scalar_prefetch = 0 : i64, scratch_operands = 1 : i64, tpu.core_type = #tpu.core_type<tc>} {
    %c0 = arith.constant 0 : index
    %c0_0 = arith.constant 0 : index
    %0 = vector.load %arg0[%c0, %c0_0] : memref<8x160xf32, #tpu.memory_space<vmem>>, vector<8x160xf32>
    %c0_1 = arith.constant 0 : index
    %c0_2 = arith.constant 0 : index
    %1 = vector.load %arg10[%c0_1, %c0_2] : memref<8x160xf32, #tpu.memory_space<vmem>>, vector<8x160xf32>
    tpu.vector_store %arg10[%c0_1, %c0_2], %0 {strides = array<i32>} : memref<8x160xf32, #tpu.memory_space<vmem>>, vector<8x160xf32>,
    %c0_3 = arith.constant 0 : index
    %c0_4 = arith.constant 0 : index
    %c0_5 = arith.constant 0 : index
    %2 = vector.load %arg1[%c0_3, %c0_4, %c0_5] : memref<2x8x32xf32, #tpu.memory_space<vmem>>, vector<1x8x32xf32>
    %3 = vector.shape_cast %2 : vector<1x8x32xf32> to vector<8x32xf32>
    %c0_6 = arith.constant 0 : index
    %c128 = arith.constant 128 : index
    %4 = vector.load %arg10[%c0_6, %c128] : memref<8x160xf32, #tpu.memory_space<vmem>>, vector<8x32xf32>
    tpu.vector_store %arg10[%c0_6, %c128], %3 {strides = array<i32>} : memref<8x160xf32, #tpu.memory_space<vmem>>, vector<8x32xf32>,
    %c0_7 = arith.constant 0 : index
    %c0_8 = arith.constant 0 : index
    %5 = vector.load %arg10[%c0_7, %c0_8] : memref<8x160xf32, #tpu.memory_space<vmem>>, vector<8x160xf32>
    %c0_9 = arith.constant 0 : index
    %c0_10 = arith.constant 0 : index
    %c0_11 = arith.constant 0 : index
    %6 = vector.load %arg3[%c0_9, %c0_10, %c0_11] : memref<2x160x128xf32, #tpu.memory_space<vmem>>, vector<1x160x128xf32>
    %7 = vector.shape_cast %6 : vector<1x160x128xf32> to vector<160x128xf32>
    %cst = arith.constant dense<0.000000e+00> : vector<8x128xf32>
    %8 = tpu.matmul %5, %7, %cst {dimension_numbers = #tpu.dot_dimension_numbers<[1], [0], [0], [1], [0, 0, 1, 1], [], []>} : vector<8x160xf32>, vector<160x128xf32>, vector<8x128xf32> -> vector<8x128xf32>
    %c0_12 = arith.constant 0 : index
    %c0_13 = arith.constant 0 : index
    %c0_14 = arith.constant 0 : index
    %9 = vector.load %arg4[%c0_12, %c0_13, %c0_14] : memref<2x1x128xf32, #tpu.memory_space<vmem>>, vector<1x1x128xf32>
    %10 = vector.shape_cast %9 : vector<1x1x128xf32> to vector<1x128xf32>
    %11 = vector.broadcast %10 : vector<1x128xf32> to vector<8x128xf32>
    %12 = arith.addf %8, %11 : vector<8x128xf32>
    %13 = arith.negf %12 : vector<8x128xf32>
    %14 = math.exp %13 : vector<8x128xf32>
    %cst_15 = arith.constant 1.000000e+00 : f32
    %15 = vector.broadcast %cst_15 : f32 to vector<8x128xf32>
    %16 = arith.addf %15, %14 : vector<8x128xf32>
    %17 = arith.divf %15, %16 : vector<8x128xf32>
    %18 = math.tanh %12 : vector<8x128xf32>
    %19 = vector.extract_strided_slice %17 {offsets = [0, 0], sizes = [8, 32], strides = [1, 1]} : vector<8x128xf32> to vector<8x32xf32>
    %20 = vector.extract_strided_slice %17 {offsets = [0, 32], sizes = [8, 32], strides = [1, 1]} : vector<8x128xf32> to vector<8x32xf32>
    %21 = vector.extract_strided_slice %18 {offsets = [0, 64], sizes = [8, 32], strides = [1, 1]} : vector<8x128xf32> to vector<8x32xf32>
    %22 = vector.extract_strided_slice %17 {offsets = [0, 96], sizes = [8, 32], strides = [1, 1]} : vector<8x128xf32> to vector<8x32xf32>
    %c0_16 = arith.constant 0 : index
    %c0_17 = arith.constant 0 : index
    %c0_18 = arith.constant 0 : index
    %23 = vector.load %arg2[%c0_16, %c0_17, %c0_18] : memref<2x8x32xf32, #tpu.memory_space<vmem>>, vector<1x8x32xf32>
    %24 = vector.shape_cast %23 : vector<1x8x32xf32> to vector<8x32xf32>
    %25 = arith.mulf %20, %24 : vector<8x32xf32>
    %26 = arith.mulf %19, %21 : vector<8x32xf32>
    %27 = arith.addf %25, %26 : vector<8x32xf32>
    %28 = math.tanh %27 : vector<8x32xf32>
    %29 = arith.mulf %22, %28 : vector<8x32xf32>
    %c0_19 = arith.constant 0 : index
    %c0_20 = arith.constant 0 : index
    %c0_21 = arith.constant 0 : index
    %30 = vector.load %arg8[%c0_19, %c0_20, %c0_21] : memref<2x8x32xf32, #tpu.memory_space<vmem>>, vector<1x8x32xf32>
    %31 = vector.shape_cast %30 : vector<1x8x32xf32> to vector<8x32xf32>
    %32 = vector.shape_cast %29 : vector<8x32xf32> to vector<1x8x32xf32>
    tpu.vector_store %arg8[%c0_19, %c0_20, %c0_21], %32 {strides = array<i32>} : memref<2x8x32xf32, #tpu.memory_space<vmem>>, vector<1x8x32xf32>,
    %c0_22 = arith.constant 0 : index
    %c0_23 = arith.constant 0 : index
    %c0_24 = arith.constant 0 : index
    %33 = vector.load %arg9[%c0_22, %c0_23, %c0_24] : memref<2x8x32xf32, #tpu.memory_space<vmem>>, vector<1x8x32xf32>
    %34 = vector.shape_cast %33 : vector<1x8x32xf32> to vector<8x32xf32>
    %35 = vector.shape_cast %27 : vector<8x32xf32> to vector<1x8x32xf32>
    tpu.vector_store %arg9[%c0_22, %c0_23, %c0_24], %35 {strides = array<i32>} : memref<2x8x32xf32, #tpu.memory_space<vmem>>, vector<1x8x32xf32>,
    %c0_25 = arith.constant 0 : index
    %c0_26 = arith.constant 0 : index
    %36 = vector.load %arg10[%c0_25, %c0_26] : memref<8x160xf32, #tpu.memory_space<vmem>>, vector<8x32xf32>
    tpu.vector_store %arg10[%c0_25, %c0_26], %29 {strides = array<i32>} : memref<8x160xf32, #tpu.memory_space<vmem>>, vector<8x32xf32>,
    %c1 = arith.constant 1 : index
    %c0_27 = arith.constant 0 : index
    %c0_28 = arith.constant 0 : index
    %37 = vector.load %arg1[%c1, %c0_27, %c0_28] : memref<2x8x32xf32, #tpu.memory_space<vmem>>, vector<1x8x32xf32>
    %38 = vector.shape_cast %37 : vector<1x8x32xf32> to vector<8x32xf32>
    %c0_29 = arith.constant 0 : index
    %c128_30 = arith.constant 128 : index
    %39 = vector.load %arg10[%c0_29, %c128_30] : memref<8x160xf32, #tpu.memory_space<vmem>>, vector<8x32xf32>
    tpu.vector_store %arg10[%c0_29, %c128_30], %38 {strides = array<i32>} : memref<8x160xf32, #tpu.memory_space<vmem>>, vector<8x32xf32>,
    %c0_31 = arith.constant 0 : index
    %c0_32 = arith.constant 0 : index
    %40 = vector.load %arg10[%c0_31, %c0_32] : memref<8x160xf32, #tpu.memory_space<vmem>>, vector<8x160xf32>
    %c1_33 = arith.constant 1 : index
    %c0_34 = arith.constant 0 : index
    %c0_35 = arith.constant 0 : index
    %41 = vector.load %arg3[%c1_33, %c0_34, %c0_35] : memref<2x160x128xf32, #tpu.memory_space<vmem>>, vector<1x160x128xf32>
    %42 = vector.shape_cast %41 : vector<1x160x128xf32> to vector<160x128xf32>
    %cst_36 = arith.constant dense<0.000000e+00> : vector<8x128xf32>
    %43 = tpu.matmul %40, %42, %cst_36 {dimension_numbers = #tpu.dot_dimension_numbers<[1], [0], [0], [1], [0, 0, 1, 1], [], []>} : vector<8x160xf32>, vector<160x128xf32>, vector<8x128xf32> -> vector<8x128xf32>
    %c1_37 = arith.constant 1 : index
    %c0_38 = arith.constant 0 : index
    %c0_39 = arith.constant 0 : index
    %44 = vector.load %arg4[%c1_37, %c0_38, %c0_39] : memref<2x1x128xf32, #tpu.memory_space<vmem>>, vector<1x1x128xf32>
    %45 = vector.shape_cast %44 : vector<1x1x128xf32> to vector<1x128xf32>
    %46 = vector.broadcast %45 : vector<1x128xf32> to vector<8x128xf32>
    %47 = arith.addf %43, %46 : vector<8x128xf32>
    %48 = arith.negf %47 : vector<8x128xf32>
    %49 = math.exp %48 : vector<8x128xf32>
    %cst_40 = arith.constant 1.000000e+00 : f32
    %50 = vector.broadcast %cst_40 : f32 to vector<8x128xf32>
    %51 = arith.addf %50, %49 : vector<8x128xf32>
    %52 = arith.divf %50, %51 : vector<8x128xf32>
    %53 = math.tanh %47 : vector<8x128xf32>
    %54 = vector.extract_strided_slice %52 {offsets = [0, 0], sizes = [8, 32], strides = [1, 1]} : vector<8x128xf32> to vector<8x32xf32>
    %55 = vector.extract_strided_slice %52 {offsets = [0, 32], sizes = [8, 32], strides = [1, 1]} : vector<8x128xf32> to vector<8x32xf32>
    %56 = vector.extract_strided_slice %53 {offsets = [0, 64], sizes = [8, 32], strides = [1, 1]} : vector<8x128xf32> to vector<8x32xf32>
    %57 = vector.extract_strided_slice %52 {offsets = [0, 96], sizes = [8, 32], strides = [1, 1]} : vector<8x128xf32> to vector<8x32xf32>
    %c1_41 = arith.constant 1 : index
    %c0_42 = arith.constant 0 : index
    %c0_43 = arith.constant 0 : index
    %58 = vector.load %arg2[%c1_41, %c0_42, %c0_43] : memref<2x8x32xf32, #tpu.memory_space<vmem>>, vector<1x8x32xf32>
    %59 = vector.shape_cast %58 : vector<1x8x32xf32> to vector<8x32xf32>
    %60 = arith.mulf %55, %59 : vector<8x32xf32>
    %61 = arith.mulf %54, %56 : vector<8x32xf32>
    %62 = arith.addf %60, %61 : vector<8x32xf32>
    %63 = math.tanh %62 : vector<8x32xf32>
    %64 = arith.mulf %57, %63 : vector<8x32xf32>
    %c1_44 = arith.constant 1 : index
    %c0_45 = arith.constant 0 : index
    %c0_46 = arith.constant 0 : index
    %65 = vector.load %arg8[%c1_44, %c0_45, %c0_46] : memref<2x8x32xf32, #tpu.memory_space<vmem>>, vector<1x8x32xf32>
    %66 = vector.shape_cast %65 : vector<1x8x32xf32> to vector<8x32xf32>
    %67 = vector.shape_cast %64 : vector<8x32xf32> to vector<1x8x32xf32>
    tpu.vector_store %arg8[%c1_44, %c0_45, %c0_46], %67 {strides = array<i32>} : memref<2x8x32xf32, #tpu.memory_space<vmem>>, vector<1x8x32xf32>,
    %c1_47 = arith.constant 1 : index
    %c0_48 = arith.constant 0 : index
    %c0_49 = arith.constant 0 : index
    %68 = vector.load %arg9[%c1_47, %c0_48, %c0_49] : memref<2x8x32xf32, #tpu.memory_space<vmem>>, vector<1x8x32xf32>
    %69 = vector.shape_cast %68 : vector<1x8x32xf32> to vector<8x32xf32>
    %70 = vector.shape_cast %62 : vector<8x32xf32> to vector<1x8x32xf32>
    tpu.vector_store %arg9[%c1_47, %c0_48, %c0_49], %70 {strides = array<i32>} : memref<2x8x32xf32, #tpu.memory_space<vmem>>, vector<1x8x32xf32>,
    %c0_50 = arith.constant 0 : index
    %c0_51 = arith.constant 0 : index
    %71 = vector.load %arg5[%c0_50, %c0_51] : memref<32x128xf32, #tpu.memory_space<vmem>>, vector<32x128xf32>
    %cst_52 = arith.constant dense<0.000000e+00> : vector<8x128xf32>
    %72 = tpu.matmul %64, %71, %cst_52 {dimension_numbers = #tpu.dot_dimension_numbers<[1], [0], [0], [1], [0, 0, 1, 1], [], []>} : vector<8x32xf32>, vector<32x128xf32>, vector<8x128xf32> -> vector<8x128xf32>
    %c0_53 = arith.constant 0 : index
    %c0_54 = arith.constant 0 : index
    %73 = vector.load %arg6[%c0_53, %c0_54] : memref<1x128xf32, #tpu.memory_space<vmem>>, vector<1x128xf32>
    %74 = vector.broadcast %73 : vector<1x128xf32> to vector<8x128xf32>
    %75 = arith.addf %72, %74 : vector<8x128xf32>
    %c0_55 = arith.constant 0 : index
    %c0_56 = arith.constant 0 : index
    %76 = vector.load %arg7[%c0_55, %c0_56] : memref<8x128xf32, #tpu.memory_space<vmem>>, vector<8x128xf32>
    tpu.vector_store %arg7[%c0_55, %c0_56], %75 {strides = array<i32>} : memref<8x128xf32, #tpu.memory_space<vmem>>, vector<8x128xf32>,
    return
  }
}

</mosaic_0001>

<llo_original>
// kernel: step.1
$region0: #{step.1}
  #allocation0 [shape = 'u32[]', space=smem, size = 0x4, offset = 0x4, fixed_abs, tag = 'smem constant byte address 0x4 - core index']
  #allocation1 [shape = 'u32[72,128]{1,0:T(1,128)}', space=vmem, size = 0x9000, scoped, tag = 'internal scratch']
  #allocation2 [shape = 'f32[8,160]{1,0:T(8,128)}', space=vmem, size = 0x2000, scoped, tag = 'scratch operand']
  %s0 = inlined_call_operand.vmem [shape: f32[8,160], index: 0, kind: input, shape index: {}]
  %s1 = inlined_call_operand.vmem [shape: f32[2,8,32], index: 1, kind: input, shape index: {}, may-alias: {1,8}]
  %s2 = inlined_call_operand.vmem [shape: f32[2,8,32], index: 2, kind: input, shape index: {}, may-alias: {2,9}]
  %s3 = inlined_call_operand.hbm [shape: f32[2,160,128], index: 3, kind: input, shape index: {}]
  %s4 = inlined_call_operand.vmem [shape: f32[2,1,128], index: 4, kind: input, shape index: {}]
  %s5 = inlined_call_operand.vmem [shape: f32[32,128], index: 5, kind: input, shape index: {}]
  %s6 = inlined_call_operand.vmem [shape: f32[1,128], index: 6, kind: input, shape index: {}]
  %s7 = inlined_call_operand.vmem [shape: f32[8,128], index: 7, kind: output, shape index: {0}]
  %s8 = inlined_call_operand.vmem [shape: f32[2,8,32], index: 8, kind: output, shape index: {1}, may-alias: {1,8}]
  %s9 = inlined_call_operand.vmem [shape: f32[2,8,32], index: 9, kind: output, shape index: {2}, may-alias: {2,9}]
  %10 = xla_tuple %s7, %s8, %s9
  %s11 = sld [smem:[#allocation0]]
  $region58: #{step.1} parent=0
    _
  %s13 = ssub.s32 1, %s11
  %s14 = scalar_select 0, %s13, %s11
  $region1: #{step.1} parent=0
    #allocation3 [shape = 'u8[163840]{0}', space=vmem, size = 0x28000, scoped, tag = 'input window, operand 3, single buffered']
    #allocation4 [shape = 's32[1]{0}', space=sflag, size = 0x4, scoped, tag = 'scoped memory for step.1']
    %15 = vsyncpa [#allocation4], 0
    // Predicated region
    $region2: #{step.1} parent=1 // pred_check
      _
    $region3: #{step.1} parent=1 // pred_check_branch
      %17 = sbr.rel (0) target = $region5
    $region4: #{step.1} parent=1 // pred_region
      _
    $region5: #{step.1} parent=1 // pred_fallthru
      _
    // Predicated region
    $region6: #{step.1} parent=1 // pred_check
      _
    $region7: #{step.1} parent=1 // pred_check_branch
      %19 = sbr.rel (0) target = $region9
    $region8: #{step.1} parent=1 // pred_region
      _
    $region9: #{step.1} parent=1 // pred_fallthru
      _
    // Predicated region
    $region10: #{step.1} parent=1 // pred_check
      _
    $region11: #{step.1} parent=1 // pred_check_branch
      %21 = sbr.rel (0) target = $region13
    $region12: #{step.1} parent=1 // pred_region
      _
    $region13: #{step.1} parent=1 // pred_fallthru
      _
    // Predicated region
    $region14: #{step.1} parent=1 // pred_check
      _
    $region15: #{step.1} parent=1 // pred_check_branch
      %23 = sbr.rel (0) target = $region17
    $region16: #{step.1} parent=1 // pred_region
      %25 = vsyncadd [#allocation4], 0
      %s26 = sshll.u32 %s3, 4
      %s27 = int_to_ptr.hbm [resolvable:$true] %s26
      %s28 = sshll.u32 [#allocation3], 4
      %s29 = int_to_ptr.vmem [resolvable:$true] %s28
      %34 = dma.hbm_to_vmem [thread:$0]  %s27, 5120, %s29, [#allocation4], 128, 128, 8
    $region17: #{step.1} parent=1 // pred_fallthru
      _
    // Predicated region
    $region18: #{step.1} parent=1 // pred_check
      _
    $region19: #{step.1} parent=1 // pred_check_branch
      %36 = sbr.rel (0) target = $region21
    $region20: #{step.1} parent=1 // pred_region
      _
    $region21: #{step.1} parent=1 // pred_fallthru
      _
    // Predicated region
    $region22: #{step.1} parent=1 // pred_check
      _
    $region23: #{step.1} parent=1 // pred_check_branch
      %38 = sbr.rel (0) target = $region25
    $region24: #{step.1} parent=1 // pred_region
      _
    $region25: #{step.1} parent=1 // pred_fallthru
      _
    // Predicated region
    $region26: #{step.1} parent=1 // pred_check
      _
    $region27: #{step.1} parent=1 // pred_check_branch
      %40 = sbr.rel (0) target = $region29
    $region28: #{step.1} parent=1 // pred_region
      _
    $region29: #{step.1} parent=1 // pred_fallthru
      _
    // Predicated region
    $region30: #{step.1} parent=1 // pred_check
      _
    $region31: #{step.1} parent=1 // pred_check_branch
      %42 = sbr.rel (0) target = $region33
    $region32: #{step.1} parent=1 // pred_region
      %44 = dma.done [#allocation4], 5120
    $region33: #{step.1} parent=1 // pred_fallthru
      _
    %v45 = vld [vmem:[%s0] sm:$0xff]
    %v46 = vld [vmem:[%s0 + $0x8] sm:$0xff]
    %47 = vst [vmem:[#allocation2] sm:$0xff] %v45
    %vm48 = vcmask 261120
    %49 = vst.msk [vmem:[#allocation2 + $0x8] sm:$0xff] %vm48, %v46
    %v50 = vld [vmem:[%s1] sm:$0xff]
    %51 = vst.msk [vmem:[#allocation2 + $0x8] sm:$0xff] %vm48, %v50
    %v52 = vld [vmem:[#allocation2] sm:$0xff]
    %v53 = vld [vmem:[#allocation2 + $0x8] sm:$0xff]
    %v54 = vld [vmem:[#allocation3] sm:$0xff]
    %v55 = vld [vmem:[#allocation3 + $0x8] sm:$0xff]
    %v56 = vld [vmem:[#allocation3 + $0x10] sm:$0xff]
    %v57 = vld [vmem:[#allocation3 + $0x18] sm:$0xff]
    %v58 = vld [vmem:[#allocation3 + $0x20] sm:$0xff]
    %v59 = vld [vmem:[#allocation3 + $0x28] sm:$0xff]
    %v60 = vld [vmem:[#allocation3 + $0x30] sm:$0xff]
    %v61 = vld [vmem:[#allocation3 + $0x38] sm:$0xff]
    %v62 = vld [vmem:[#allocation3 + $0x40] sm:$0xff]
    %v63 = vld [vmem:[#allocation3 + $0x48] sm:$0xff]
    %v64 = vld [vmem:[#allocation3 + $0x50] sm:$0xff]
    %v65 = vld [vmem:[#allocation3 + $0x58] sm:$0xff]
    %v66 = vld [vmem:[#allocation3 + $0x60] sm:$0xff]
    %v67 = vld [vmem:[#allocation3 + $0x68] sm:$0xff]
    %v68 = vld [vmem:[#allocation3 + $0x70] sm:$0xff]
    %v69 = vld [vmem:[#allocation3 + $0x78] sm:$0xff]
    %v70 = vld [vmem:[#allocation3 + $0x80] sm:$0xff]
    %v71 = vld [vmem:[#allocation3 + $0x88] sm:$0xff]
    %v72 = vld [vmem:[#allocation3 + $0x90] sm:$0xff]
    %v73 = vld [vmem:[#allocation3 + $0x98] sm:$0xff]
    %v74 = vld [vmem:[%s4] sm:$0x1]
    %v76 = vperm.slane %v74, 0
    %v79 = vsel %vm48, %v53, 0
    %81 = vmatpush.msra.mxu0 %v69
    %82 = vmatpush.msra.mxu0 %v68
    %83 = vmatpush.msra.mxu0 %v67
    %84 = vmatpush.msra.mxu0 %v66
    %85 = vmatpush.msra.mxu0 %v65
    %86 = vmatpush.msra.mxu0 %v64
    %87 = vmatpush.msra.mxu0 %v63
    %88 = vmatpush.msra.mxu0 %v62
    %89 = vmatpush.msra.mxu0 %v61
    %90 = vmatpush.msra.mxu0 %v60
    %91 = vmatpush.msra.mxu0 %v59
    %92 = vmatpush.msra.mxu0 %v58
    %93 = vmatpush.msra.mxu0 %v57
    %94 = vmatpush.msra.mxu0 %v56
    %95 = vmatpush.msra.mxu0 %v55
    %96 = vmatpush.msra.mxu0 %v54
    %97 = vmatmul.f32.gmra.mxu0 %v52
    %v98 = vpop.f32.mrf.mxu0
    %v99 = vadd.f32 %v76, %v98
    %100 = vdwg.mxu0
    %101 = vmatpush.msra.mxu0 0.0
    %102 = vmatpush.msra.mxu0 0.0
    %103 = vmatpush.msra.mxu0 0.0
    %104 = vmatpush.msra.mxu0 0.0
    %105 = vmatpush.msra.mxu0 0.0
    %106 = vmatpush.msra.mxu0 0.0
    %107 = vmatpush.msra.mxu0 0.0
    %108 = vmatpush.msra.mxu0 0.0
    %109 = vmatpush.msra.mxu0 0.0
    %110 = vmatpush.msra.mxu0 0.0
    %111 = vmatpush.msra.mxu0 0.0
    %112 = vmatpush.msra.mxu0 0.0
    %113 = vmatpush.msra.mxu0 %v73
    %114 = vmatpush.msra.mxu0 %v72
    %115 = vmatpush.msra.mxu0 %v71
    %116 = vmatpush.msra.mxu0 %v70
    %117 = vmatmul.f32.gmra.mxu0 %v79
    %v118 = vpop.f32.mrf.mxu0
    %v119 = vadd.f32 %v99, %v118
    %120 = vdwg.mxu0
    %v121 = vxor.u32 %v119, 2147483648
    %v122 = vmul.f32 %v121, 1.442695
    %v123 = vpow.pop %v122
    %v124 = vadd.f32 %v123, 1.0
    %v125 = vrcp.pop %v124
    %v126 = vmul.f32 %v124, %v125
    %v127 = vsub.f32 1.0, %v126
    %v128 = vmul.f32 %v125, %v127
    %v129 = vadd.f32 %v125, %v128
    %vm130 = vweird.f32 %v124
    %vm131 = vweird.f32 %v125
    %vm132 = vmor %vm130, %vm131
    %v133 = vsel %vm132, %v125, %v129
    %v134 = vand.u32 2147483647, %v124
    %vm135 = vcmp.eq.f32.partialorder %v134, 8.507059e+37
    %v136 = vand.u32 %v124, 2147483648
    %v137 = vor.u32 1.1754944e-38, %v136
    %v138 = vsel %vm135, %v137, %v133
    %v139 = vmul.f32 1.0, %v138
    %v140 = vtanh.pop %v119
    %v141 = vld [vmem:[%s2] sm:$0xff]
    %143 = vrot.lane.b32.xlu0 %v141, 32
    %v144 = vpop.permute.xlu0 %143
    %v146 = vmul.f32 %v139, %v144
    %148 = vrot.lane.b32.xlu0 %v140, 64
    %v149 = vpop.permute.xlu0 %148
    %v151 = vmul.f32 %v139, %v149
    %153 = vrot.lane.b32.xlu0 %v151, 32
    %v154 = vpop.permute.xlu0 %153
    %v156 = vadd.f32 %v146, %v154
    %v157 = vtanh.pop %v156
    %159 = vrot.lane.b32.xlu0 %v157, 64
    %v160 = vpop.permute.xlu0 %159
    %v162 = vmul.f32 %v139, %v160
    %164 = vrot.lane.b32.xlu0 %v162, 32
    %v165 = vpop.permute.xlu0 %164
    %167 = vst.msk [vmem:[%s8] sm:$0xff] %vm48, %v165
    %169 = vrot.lane.b32.xlu0 %v156, 96
    %v170 = vpop.permute.xlu0 %169
    %172 = vst.msk [vmem:[%s9] sm:$0xff] %vm48, %v170
    %173 = vst.msk [vmem:[#allocation2] sm:$0xff] %vm48, %v165
    %s174 = scalar_lea.vmem %s1, 8
    %v175 = vld [vmem:[%s174] sm:$0xff]
    %176 = vst.msk [vmem:[#allocation2 + $0x8] sm:$0xff] %vm48, %v175
    %v177 = vld [vmem:[#allocation2] sm:$0xff]
    %v178 = vld [vmem:[#allocation2 + $0x8] sm:$0xff]
    %s179 = scalar_lea.vmem [#allocation3], 160
    %v180 = vld [vmem:[%s179] sm:$0xff]
    %v181 = vld [vmem:[%s179 + $0x8] sm:$0xff]
    %v182 = vld [vmem:[%s179 + $0x10] sm:$0xff]
    %v183 = vld [vmem:[%s179 + $0x18] sm:$0xff]
    %v184 = vld [vmem:[%s179 + $0x20] sm:$0xff]
    %v185 = vld [vmem:[%s179 + $0x28] sm:$0xff]
    %v186 = vld [vmem:[%s179 + $0x30] sm:$0xff]
    %v187 = vld [vmem:[%s179 + $0x38] sm:$0xff]
    %v188 = vld [vmem:[%s179 + $0x40] sm:$0xff]
    %v189 = vld [vmem:[%s179 + $0x48] sm:$0xff]
    %v190 = vld [vmem:[%s179 + $0x50] sm:$0xff]
    %v191 = vld [vmem:[%s179 + $0x58] sm:$0xff]
    %v192 = vld [vmem:[%s179 + $0x60] sm:$0xff]
    %v193 = vld [vmem:[%s179 + $0x68] sm:$0xff]
    %v194 = vld [vmem:[%s179 + $0x70] sm:$0xff]
    %v195 = vld [vmem:[%s179 + $0x78] sm:$0xff]
    %v196 = vld [vmem:[%s179 + $0x80] sm:$0xff]
    %v197 = vld [vmem:[%s179 + $0x88] sm:$0xff]
    %v198 = vld [vmem:[%s179 + $0x90] sm:$0xff]
    %v199 = vld [vmem:[%s179 + $0x98] sm:$0xff]
    %s200 = scalar_lea.vmem %s4, 1
    %v201 = vld [vmem:[%s200] sm:$0x1]
    %v203 = vperm.slane %v201, 0
    %v206 = vsel %vm48, %v178, 0
    %208 = vmatpush.msra.mxu0 %v195
    %209 = vmatpush.msra.mxu0 %v194
    %210 = vmatpush.msra.mxu0 %v193
    %211 = vmatpush.msra.mxu0 %v192
    %212 = vmatpush.msra.mxu0 %v191
    %213 = vmatpush.msra.mxu0 %v190
    %214 = vmatpush.msra.mxu0 %v189
    %215 = vmatpush.msra.mxu0 %v188
    %216 = vmatpush.msra.mxu0 %v187
    %217 = vmatpush.msra.mxu0 %v186
    %218 = vmatpush.msra.mxu0 %v185
    %219 = vmatpush.msra.mxu0 %v184
    %220 = vmatpush.msra.mxu0 %v183
    %221 = vmatpush.msra.mxu0 %v182
    %222 = vmatpush.msra.mxu0 %v181
    %223 = vmatpush.msra.mxu0 %v180
    %224 = vmatmul.f32.gmra.mxu0 %v177
    %v225 = vpop.f32.mrf.mxu0
    %v226 = vadd.f32 %v203, %v225
    %227 = vdwg.mxu0
    %228 = vmatpush.msra.mxu0 0.0
    %229 = vmatpush.msra.mxu0 0.0
    %230 = vmatpush.msra.mxu0 0.0
    %231 = vmatpush.msra.mxu0 0.0
    %232 = vmatpush.msra.mxu0 0.0
    %233 = vmatpush.msra.mxu0 0.0
    %234 = vmatpush.msra.mxu0 0.0
    %235 = vmatpush.msra.mxu0 0.0
    %236 = vmatpush.msra.mxu0 0.0
    %237 = vmatpush.msra.mxu0 0.0
    %238 = vmatpush.msra.mxu0 0.0
    %239 = vmatpush.msra.mxu0 0.0
    %240 = vmatpush.msra.mxu0 %v199
    %241 = vmatpush.msra.mxu0 %v198
    %242 = vmatpush.msra.mxu0 %v197
    %243 = vmatpush.msra.mxu0 %v196
    %244 = vmatmul.f32.gmra.mxu0 %v206
    %v245 = vpop.f32.mrf.mxu0
    %v246 = vadd.f32 %v226, %v245
    %247 = vdwg.mxu0
    %v248 = vxor.u32 %v246, 2147483648
    %v249 = vmul.f32 %v248, 1.442695
    %v250 = vpow.pop %v249
    %v251 = vadd.f32 %v250, 1.0
    %v252 = vrcp.pop %v251
    %v253 = vmul.f32 %v251, %v252
    %v254 = vsub.f32 1.0, %v253
    %v255 = vmul.f32 %v252, %v254
    %v256 = vadd.f32 %v252, %v255
    %vm257 = vweird.f32 %v251
    %vm258 = vweird.f32 %v252
    %vm259 = vmor %vm257, %vm258
    %v260 = vsel %vm259, %v252, %v256
    %v261 = vand.u32 2147483647, %v251
    %vm262 = vcmp.eq.f32.partialorder %v261, 8.507059e+37
    %v263 = vand.u32 %v251, 2147483648
    %v264 = vor.u32 1.1754944e-38, %v263
    %v265 = vsel %vm262, %v264, %v260
    %v266 = vmul.f32 1.0, %v265
    %v267 = vtanh.pop %v246
    %s268 = scalar_lea.vmem %s2, 8
    %v269 = vld [vmem:[%s268] sm:$0xff]
    %271 = vrot.lane.b32.xlu0 %v269, 32
    %v272 = vpop.permute.xlu0 %271
    %v274 = vmul.f32 %v266, %v272
    %276 = vrot.lane.b32.xlu0 %v267, 64
    %v277 = vpop.permute.xlu0 %276
    %v279 = vmul.f32 %v266, %v277
    %281 = vrot.lane.b32.xlu0 %v279, 32
    %v282 = vpop.permute.xlu0 %281
    %v284 = vadd.f32 %v274, %v282
    %v285 = vtanh.pop %v284
    %287 = vrot.lane.b32.xlu0 %v285, 64
    %v288 = vpop.permute.xlu0 %287
    %v290 = vmul.f32 %v266, %v288
    %292 = vrot.lane.b32.xlu0 %v290, 32
    %v293 = vpop.permute.xlu0 %292
    %s295 = scalar_lea.vmem %s8, 8
    %296 = vst.msk [vmem:[%s295] sm:$0xff] %vm48, %v293
    %298 = vrot.lane.b32.xlu0 %v284, 96
    %v299 = vpop.permute.xlu0 %298
    %s301 = scalar_lea.vmem %s9, 8
    %302 = vst.msk [vmem:[%s301] sm:$0xff] %vm48, %v299
    %v303 = vld [vmem:[%s5] sm:$0xff]
    %v304 = vld [vmem:[%s5 + $0x8] sm:$0xff]
    %v305 = vld [vmem:[%s5 + $0x10] sm:$0xff]
    %v306 = vld [vmem:[%s5 + $0x18] sm:$0xff]
    %v307 = vld [vmem:[%s6] sm:$0x1]
    %v309 = vperm.slane %v307, 0
    %v311 = vsel %vm48, %v293, 0
    %313 = vmatpush.msra.mxu0 0.0
    %314 = vmatpush.msra.mxu0 0.0
    %315 = vmatpush.msra.mxu0 0.0
    %316 = vmatpush.msra.mxu0 0.0
    %317 = vmatpush.msra.mxu0 0.0
    %318 = vmatpush.msra.mxu0 0.0
    %319 = vmatpush.msra.mxu0 0.0
    %320 = vmatpush.msra.mxu0 0.0
    %321 = vmatpush.msra.mxu0 0.0
    %322 = vmatpush.msra.mxu0 0.0
    %323 = vmatpush.msra.mxu0 0.0
    %324 = vmatpush.msra.mxu0 0.0
    %325 = vmatpush.msra.mxu0 %v306
    %326 = vmatpush.msra.mxu0 %v305
    %327 = vmatpush.msra.mxu0 %v304
    %328 = vmatpush.msra.mxu0 %v303
    %329 = vmatmul.f32.gmra.mxu0 %v311
    %v330 = vpop.f32.mrf.mxu0
    %v331 = vadd.f32 %v309, %v330
    %332 = vdwg.mxu0
    %333 = vst [vmem:[%s7] sm:$0xff] %v331
    // Predicated region
    $region34: #{step.1} parent=1 // pred_check
      _
    $region35: #{step.1} parent=1 // pred_check_branch
      %335 = sbr.rel (0) target = $region37
    $region36: #{step.1} parent=1 // pred_region
      _
    $region37: #{step.1} parent=1 // pred_fallthru
      _
    // Predicated region
    $region38: #{step.1} parent=1 // pred_check
      _
    $region39: #{step.1} parent=1 // pred_check_branch
      %337 = sbr.rel (0) target = $region41
    $region40: #{step.1} parent=1 // pred_region
      _
    $region41: #{step.1} parent=1 // pred_fallthru
      _
    // Predicated region
    $region42: #{step.1} parent=1 // pred_check
      _
    $region43: #{step.1} parent=1 // pred_check_branch
      %339 = sbr.rel (0) target = $region45
    $region44: #{step.1} parent=1 // pred_region
      _
    $region45: #{step.1} parent=1 // pred_fallthru
      _
    // Predicated region
    $region46: #{step.1} parent=1 // pred_check
      _
    $region47: #{step.1} parent=1 // pred_check_branch
      %341 = sbr.rel (0) target = $region49
    $region48: #{step.1} parent=1 // pred_region
      _
    $region49: #{step.1} parent=1 // pred_fallthru
      _
    // Predicated region
    $region50: #{step.1} parent=1 // pred_check
      _
    $region51: #{step.1} parent=1 // pred_check_branch
      %343 = sbr.rel (0) target = $region53
    $region52: #{step.1} parent=1 // pred_region
      _
    $region53: #{step.1} parent=1 // pred_fallthru
      _
    // Predicated region
    $region54: #{step.1} parent=1 // pred_check
      _
    $region55: #{step.1} parent=1 // pred_check_branch
      %345 = sbr.rel (0) target = $region57
    $region56: #{step.1} parent=1 // pred_region
      _
    $region57: #{step.1} parent=1 // pred_fallthru
      _
    %346 = vsyncpa [#allocation4], 1

</llo_original>
